<compile_context>
chip_gen: v5e
topology: v5e:2x2
jax: 0.10.0
libtpu: 0.0.40
codegen_flags: <defaults>
</compile_context>

<pallas_src>
import jax
import jax.numpy as jnp
from jax.experimental import pallas as pl
from jax.experimental.pallas import tpu as pltpu


def _color_kernel(coef_ref, x_ref, o_ref):
    # coef_ref: VMEM (TN, 1, 1)      per-batch blending coefficient
    # x_ref:    VMEM (TN, C, THW)    image tile (C on sublanes, HW on lanes)
    # o_ref:    VMEM (TN, C, THW)
    c = coef_ref[...].astype(jnp.float32)            # (TN, 1, 1)
    x = x_ref[...].astype(jnp.float32)               # (TN, C, THW)
    mean = jnp.mean(x, axis=1, keepdims=True)        # (TN, 1, THW) channel mean
    blended = mean + c * (x - mean)                  # == c*x + (1-c)*mean
    o_ref[...] = jnp.clip(blended, 0.0, 1.0).astype(o_ref.dtype)


def _choose_tiles(N, C, HW, itemsize):
    """Pick (batch_tile, lane_tile) keeping per-buffer VMEM ~<=1 MiB (padded)."""
    LANE_CAP = 4096          # multiple of 128; safe on v5e/v6e/v7x VMEM budgets
    if HW <= LANE_CAP:
        thw = HW             # full-extent lane block is always legal
    else:
        thw = LANE_CAP       # multiple of 128; edge block (if any) is masked
    # Account for sublane padding: C is physically stored as a multiple of 8.
    c_pad = ((C + 7) // 8) * 8
    tile_bytes = c_pad * thw * itemsize
    BUDGET = 1 << 20         # ~1 MiB per buffer -> tiny footprint even x buffers
    tn = max(1, min(N, BUDGET // max(tile_bytes, 1)))
    return tn, thw


def color(x, coefs):
    """x: (N, C, H, W) float, coefs: (N,) float -> (N, C, H, W) same dtype as x."""
    N, C, H, W = x.shape
    HW = H * W
    x2 = x.reshape(N, C, HW)
    coefs3 = coefs.reshape(N, 1, 1).astype(x.dtype)

    tn, thw = _choose_tiles(N, C, HW, jnp.dtype(x.dtype).itemsize)
    grid = (pl.cdiv(N, tn), pl.cdiv(HW, thw))

    out = pl.pallas_call(
        _color_kernel,
        out_shape=jax.ShapeDtypeStruct((N, C, HW), x.dtype),
        grid_spec=pltpu.PrefetchScalarGridSpec(
            num_scalar_prefetch=0,
            grid=grid,
            in_specs=[
                # (TN, 1, 1) coef block: last two dims equal full array dims.
                pl.BlockSpec((tn, 1, 1), lambda i, j: (i, 0, 0)),
                # (TN, C, THW) image block: C full, THW a multiple of 128 (or full).
                pl.BlockSpec((tn, C, thw), lambda i, j: (i, 0, j)),
            ],
            out_specs=pl.BlockSpec((tn, C, thw), lambda i, j: (i, 0, j)),
        ),
        compiler_params=pltpu.CompilerParams(
            dimension_semantics=("parallel", "parallel"),
        ),
    )(coefs3, x2)

    return out.reshape(N, C, H, W)


def color_ref(x, coefs):
    """Pure-JAX reference mirroring the PyTorch module."""
    c = coefs.reshape(-1, 1, 1, 1)
    blended = c * x + (1.0 - c) * jnp.mean(x, axis=1, keepdims=True)
    return jnp.clip(blended, 0.0, 1.0)


if __name__ == "__main__":
    key = jax.random.PRNGKey(0)
    kx, kc = jax.random.split(key)

    N, C, H, W = 2, 4, 16, 16
    x = jax.random.uniform(kx, (N, C, H, W), dtype=jnp.float32)
    # Deterministic per-batch blending coefficients (module's `coefs` param).
    coefs = jax.random.uniform(kc, (N,), dtype=jnp.float32, minval=0.2, maxval=1.5)

    out = color(x, coefs)
    out = jax.block_until_ready(out)

    ref = color_ref(x, coefs)
    assert out.shape == (N, C, H, W)
    assert out.dtype == jnp.float32
    assert jnp.allclose(out, ref, atol=1e-6, rtol=1e-6), "mismatch vs reference"

    print("KERNEL_OK")
</pallas_src>

<mosaic_0001>
module attributes {stable_mosaic.version = 11 : i64} {
  func.func @_color_kernel(%arg0: i32, %arg1: i32, %arg2: memref<2x1x1xf32, #tpu.memory_space<vmem>>, %arg3: memref<2x4x256xf32, #tpu.memory_space<vmem>>, %arg4: memref<2x4x256xf32, #tpu.memory_space<vmem>>) attributes {dimension_semantics = [#tpu.dimension_semantics<parallel>, #tpu.dimension_semantics<parallel>], iteration_bounds = array<i64: 1, 1>, scalar_prefetch = 0 : i64, scratch_operands = 0 : i64, tpu.core_type = #tpu.core_type<tc>, window_params = [{transform_indices = @transform_0, window_bounds = array<i64: 2, 1, 1>}, {transform_indices = @transform_1, window_bounds = array<i64: 2, 4, 256>}, {transform_indices = @transform_2, window_bounds = array<i64: 2, 4, 256>}]} {
    %c0 = arith.constant 0 : index
    %c0_0 = arith.constant 0 : index
    %c0_1 = arith.constant 0 : index
    %0 = vector.load %arg2[%c0, %c0_0, %c0_1] : memref<2x1x1xf32, #tpu.memory_space<vmem>>, vector<2x1x1xf32>
    %c0_2 = arith.constant 0 : index
    %c0_3 = arith.constant 0 : index
    %c0_4 = arith.constant 0 : index
    %1 = vector.load %arg3[%c0_2, %c0_3, %c0_4] : memref<2x4x256xf32, #tpu.memory_space<vmem>>, vector<2x4x256xf32>
    %cst = arith.constant dense<0.000000e+00> : vector<2x256xf32>
    %2 = vector.multi_reduction <add>, %1, %cst [1] : vector<2x4x256xf32> to vector<2x256xf32>
    %3 = vector.shape_cast %2 : vector<2x256xf32> to vector<2x1x256xf32>
    %cst_5 = arith.constant 4.000000e+00 : f32
    %4 = vector.broadcast %cst_5 : f32 to vector<2x1x256xf32>
    %5 = arith.divf %3, %4 : vector<2x1x256xf32>
    %6 = vector.broadcast %5 : vector<2x1x256xf32> to vector<2x4x256xf32>
    %7 = arith.subf %1, %6 : vector<2x4x256xf32>
    %8 = vector.broadcast %0 : vector<2x1x1xf32> to vector<2x4x256xf32>
    %9 = arith.mulf %8, %7 : vector<2x4x256xf32>
    %10 = vector.broadcast %5 : vector<2x1x256xf32> to vector<2x4x256xf32>
    %11 = arith.addf %10, %9 : vector<2x4x256xf32>
    %cst_6 = arith.constant 0.000000e+00 : f32
    %cst_7 = arith.constant 1.000000e+00 : f32
    %12 = vector.broadcast %cst_6 : f32 to vector<2x4x256xf32>
    %13 = arith.maximumf %12, %11 : vector<2x4x256xf32>
    %14 = vector.broadcast %cst_7 : f32 to vector<2x4x256xf32>
    %15 = arith.minimumf %14, %13 : vector<2x4x256xf32>
    %c0_8 = arith.constant 0 : index
    %c0_9 = arith.constant 0 : index
    %c0_10 = arith.constant 0 : index
    %16 = vector.load %arg4[%c0_8, %c0_9, %c0_10] : memref<2x4x256xf32, #tpu.memory_space<vmem>>, vector<2x4x256xf32>
    tpu.vector_store %arg4[%c0_8, %c0_9, %c0_10], %15 {strides = array<i32>} : memref<2x4x256xf32, #tpu.memory_space<vmem>>, vector<2x4x256xf32>,
    return
  }
  func.func @transform_0(%arg0: i32, %arg1: i32) -> (i32, i32, i32) {
    %c0_i32 = arith.constant 0 : i32
    %c0_i32_0 = arith.constant 0 : i32
    %c0_i32_1 = arith.constant 0 : i32
    return %arg0, %c0_i32, %c0_i32_0 : i32, i32, i32
  }
  func.func @transform_1(%arg0: i32, %arg1: i32) -> (i32, i32, i32) {
    %c0_i32 = arith.constant 0 : i32
    %c0_i32_0 = arith.constant 0 : i32
    return %arg0, %c0_i32, %arg1 : i32, i32, i32
  }
  func.func @transform_2(%arg0: i32, %arg1: i32) -> (i32, i32, i32) {
    %c0_i32 = arith.constant 0 : i32
    %c0_i32_0 = arith.constant 0 : i32
    return %arg0, %c0_i32, %arg1 : i32, i32, i32
  }
}

</mosaic_0001>

<llo_original>
// kernel: tpu_custom_call.1
$region0: #{tpu_custom_call.1}
  #allocation0 [shape = 'u32[]', space=smem, size = 0x4, offset = 0x4, fixed_abs, tag = 'smem constant byte address 0x4 - core index']
  #allocation1 [shape = 'u32[72,128]{1,0:T(1,128)}', space=vmem, size = 0x9000, scoped, tag = 'internal scratch']
  %s0 = inlined_call_operand.vmem [shape: f32[2,1,1], index: 0, kind: input, shape index: {}]
  %s1 = inlined_call_operand.hbm [shape: f32[2,4,256], index: 1, kind: input, shape index: {}]
  %s2 = inlined_call_operand.hbm [shape: f32[2,4,256], index: 2, kind: output, shape index: {}]
  %s3 = sld [smem:[#allocation0]]
  $region22: #{tpu_custom_call.1} parent=0
    _
  %s5 = ssub.s32 1, %s3
  %s6 = scalar_select 0, %s5, %s3
  $region1: #{tpu_custom_call.1} parent=0
    #allocation2 [shape = 'u8[8192]{0}', space=vmem, size = 0x2000, scoped, tag = 'input window, operand 1, single buffered']
    #allocation3 [shape = 's32[1]{0}', space=sflag, size = 0x4, scoped, tag = 'scoped memory for tpu_custom_call.1']
    #allocation4 [shape = 's32[1]{0}', space=sflag, size = 0x4, scoped, tag = 'scoped memory for tpu_custom_call.1']
    #allocation5 [shape = 'u8[8192]{0}', space=vmem, size = 0x2000, scoped, tag = 'output window, operand 0, single buffered']
    %7 = vsyncpa [#allocation3], 0
    %8 = vsyncpa [#allocation4], 0
    // Predicated region
    $region2: #{tpu_custom_call.1} parent=1 // pred_check
      _
    $region3: #{tpu_custom_call.1} parent=1 // pred_check_branch
      %10 = sbr.rel (0) target = $region5
    $region4: #{tpu_custom_call.1} parent=1 // pred_region
      _
    $region5: #{tpu_custom_call.1} parent=1 // pred_fallthru
      _
    // Predicated region
    $region6: #{tpu_custom_call.1} parent=1 // pred_check
      _
    $region7: #{tpu_custom_call.1} parent=1 // pred_check_branch
      %12 = sbr.rel (0) target = $region9
    $region8: #{tpu_custom_call.1} parent=1 // pred_region
      %14 = vsyncadd [#allocation3], 0
      %s15 = sshll.u32 %s1, 4
      %s16 = int_to_ptr.hbm [resolvable:$true] %s15
      %s17 = sshll.u32 [#allocation2], 4
      %s18 = int_to_ptr.vmem [resolvable:$true] %s17
      %23 = dma.hbm_to_vmem [thread:$0]  %s16, 256, %s18, [#allocation3], 128, 128, 8
    $region9: #{tpu_custom_call.1} parent=1 // pred_fallthru
      _
    // Predicated region
    $region10: #{tpu_custom_call.1} parent=1 // pred_check
      _
    $region11: #{tpu_custom_call.1} parent=1 // pred_check_branch
      %25 = sbr.rel (0) target = $region13
    $region12: #{tpu_custom_call.1} parent=1 // pred_region
      %27 = dma.done [#allocation3], 256
    $region13: #{tpu_custom_call.1} parent=1 // pred_fallthru
      _
    %v28 = vld [vmem:[%s0] sm:$0x1]
    %v29 = vld [vmem:[%s0 + $0x1] sm:$0x1]
    %v30 = vld [vmem:[#allocation2] sm:$0xff]
    %v31 = vld [vmem:[#allocation2 + $0x8] sm:$0xff]
    %34 = vst [vmem:[#allocation1] ss:$2 sm:$0xff] %v30
    %v35 = vld.sshfl [vmem:[#allocation1] sm:$0xff pattern:$0x75316420]
    %v36 = vld.sshfl [vmem:[#allocation1 + $0x8] sm:$0xff pattern:$0x75316420]
    %s37 = scalar_lea.vmem [#allocation1], 16
    %38 = vst [vmem:[%s37] ss:$2 sm:$0xff] %v31
    %v39 = vld.sshfl [vmem:[#allocation1 + $0x10] sm:$0xff pattern:$0x75316420]
    %v40 = vld.sshfl [vmem:[#allocation1 + $0x18] sm:$0xff pattern:$0x75316420]
    %vm45 = vcmask 1043456
    %v46 = vsel %vm45, %v35, 0.0
    %v47 = vrot.slane %v46, 4
    %v48 = vadd.f32 %v46, %v47
    %v49 = vrot.slane %v48, 2
    %v50 = vadd.f32 %v48, %v49
    %v51 = vrot.slane %v50, 1
    %v52 = vadd.f32 %v50, %v51
    %v53 = vsel %vm45, %v36, 0.0
    %v54 = vrot.slane %v53, 4
    %v55 = vadd.f32 %v53, %v54
    %v56 = vrot.slane %v55, 2
    %v57 = vadd.f32 %v55, %v56
    %v58 = vrot.slane %v57, 1
    %v59 = vadd.f32 %v57, %v58
    %v60 = vsel %vm45, %v39, 0.0
    %v61 = vrot.slane %v60, 4
    %v62 = vadd.f32 %v60, %v61
    %v63 = vrot.slane %v62, 2
    %v64 = vadd.f32 %v62, %v63
    %v65 = vrot.slane %v64, 1
    %v66 = vadd.f32 %v64, %v65
    %v67 = vsel %vm45, %v40, 0.0
    %v68 = vrot.slane %v67, 4
    %v69 = vadd.f32 %v67, %v68
    %v70 = vrot.slane %v69, 2
    %v71 = vadd.f32 %v69, %v70
    %v72 = vrot.slane %v71, 1
    %v73 = vadd.f32 %v71, %v72
    %v74 = vrcp.pop 4.0
    %v75 = vmul.f32 4.0, %v74
    %v76 = vsub.f32 1.0, %v75
    %v77 = vmul.f32 %v74, %v76
    %v78 = vadd.f32 %v74, %v77
    %vm79 = vweird.f32 %v74
    %v80 = vsel %vm79, %v74, %v78
    %v81 = vmul.f32 %v52, %v80
    %v82 = vmul.f32 %v59, %v80
    %v83 = vmul.f32 %v66, %v80
    %v84 = vmul.f32 %v73, %v80
    %v89 = vrot.slane %v82, 4
    %v90 = vrot.slane %v84, 4
    %v91 = vsel %vm45, %v81, %v89
    %v92 = vsel %vm45, %v83, %v90
    %v95 = vsub.f32 %v30, %v91
    %v96 = vsub.f32 %v31, %v92
    %v99 = vperm.slane %v28, 0
    %v100 = vperm.slane %v29, 0
    %101 = vset.pattern.permute.xlu0 0
    %102 = vperm.xlu0 %101, %v99
    %v103 = vpop.permute.xlu0 %102
    %105 = vset.pattern.permute.xlu0 0
    %106 = vperm.xlu0 %105, %v100
    %v107 = vpop.permute.xlu0 %106
    %v109 = vmul.f32 %v103, %v95
    %v110 = vmul.f32 %v107, %v96
    %113 = vst [vmem:[#allocation1] ss:$2 sm:$0xff] %v109
    %v114 = vld.sshfl [vmem:[#allocation1] sm:$0xff pattern:$0x75316420]
    %v115 = vld.sshfl [vmem:[#allocation1 + $0x8] sm:$0xff pattern:$0x75316420]
    %s116 = scalar_lea.vmem [#allocation1], 16
    %117 = vst [vmem:[%s116] ss:$2 sm:$0xff] %v110
    %v118 = vld.sshfl [vmem:[#allocation1 + $0x10] sm:$0xff pattern:$0x75316420]
    %v119 = vld.sshfl [vmem:[#allocation1 + $0x18] sm:$0xff pattern:$0x75316420]
    %v124 = vadd.f32 %v81, %v114
    %v125 = vadd.f32 %v82, %v115
    %v126 = vadd.f32 %v83, %v118
    %v127 = vadd.f32 %v84, %v119
    %v128 = vmax.f32 %v124, 0.0
    %v129 = vmax.f32 %v125, 0.0
    %v130 = vmax.f32 %v126, 0.0
    %v131 = vmax.f32 %v127, 0.0
    %v132 = vmin.f32 %v128, 1.0
    %v133 = vmin.f32 %v129, 1.0
    %v134 = vmin.f32 %v130, 1.0
    %v135 = vmin.f32 %v131, 1.0
    %v140 = vrot.slane %v133, 4
    %v141 = vrot.slane %v135, 4
    %v142 = vsel %vm45, %v132, %v140
    %v143 = vsel %vm45, %v134, %v141
    %146 = vst [vmem:[#allocation5] sm:$0xff] %v142
    %147 = vst [vmem:[#allocation5 + $0x8] sm:$0xff] %v143
    // Predicated region
    $region14: #{tpu_custom_call.1} parent=1 // pred_check
      _
    $region15: #{tpu_custom_call.1} parent=1 // pred_check_branch
      %149 = sbr.rel (0) target = $region17
    $region16: #{tpu_custom_call.1} parent=1 // pred_region
      %151 = vsyncadd [#allocation4], 0
      %s152 = sshll.u32 [#allocation5], 4
      %s153 = int_to_ptr.vmem [resolvable:$true] %s152
      %s154 = sshll.u32 %s2, 4
      %s155 = int_to_ptr.hbm [resolvable:$true] %s154
      %160 = dma.vmem_to_hbm [thread:$0]  %s153, 256, %s155, [#allocation4], 128, 128, 8
    $region17: #{tpu_custom_call.1} parent=1 // pred_fallthru
      _
    // Predicated region
    $region18: #{tpu_custom_call.1} parent=1 // pred_check
      _
    $region19: #{tpu_custom_call.1} parent=1 // pred_check_branch
      %162 = sbr.rel (0) target = $region21
    $region20: #{tpu_custom_call.1} parent=1 // pred_region
      %164 = dma.done [#allocation4], 256
    $region21: #{tpu_custom_call.1} parent=1 // pred_fallthru
      _
    %165 = vsyncpa [#allocation3], 1
    %166 = vsyncpa [#allocation4], 1

</llo_original>
